<compile_context>
chip_gen: v5e
topology: v5e:2x2
jax: 0.10.0
libtpu: 0.0.40
codegen_flags: <defaults>
</compile_context>

<pallas_src>
import jax
import jax.numpy as jnp
from jax.experimental import pallas as pl
from jax.experimental.pallas import tpu as pltpu


def _round_up(x, m):
    return ((x + m - 1) // m) * m


def graphconv_kernel(a_ref, feat_rhs_ref, feat_lhs_ref, w_self_ref, w_agg_ref,
                     b_ref, out_ref, acc_ref):
    # a_ref:        (T, T)    tile of adjacency  A[b, i-tile, k-tile]
    # feat_rhs_ref: (T, Dp)   features[b, k-tile, :]   (RHS of aggregation)
    # feat_lhs_ref: (T, Dp)   features[b, i-tile, :]   (self term, epilogue)
    # w_self_ref:   (Dp, Fp)  W[:D] padded
    # w_agg_ref:    (Dp, Fp)  W[D:] padded
    # b_ref:        (1, Fp)
    # out_ref:      (T, Fp)
    # acc_ref:      (T, Dp)   f32 scratch holding the running A @ feats tile
    k = pl.program_id(2)

    @pl.when(k == 0)
    def _init():
        acc_ref[...] = jnp.zeros_like(acc_ref)

    # Partial aggregation: A[i-tile, k-tile] @ feats[k-tile, :]
    acc_ref[...] += jnp.dot(a_ref[...], feat_rhs_ref[...],
                            preferred_element_type=jnp.float32)

    @pl.when(k == pl.num_programs(2) - 1)
    def _epilogue():
        # concat([feats, agg]) @ W  ==  feats @ W_self + agg @ W_agg
        h = jnp.dot(feat_lhs_ref[...].astype(jnp.float32), w_self_ref[...],
                    preferred_element_type=jnp.float32)
        h = h + jnp.dot(acc_ref[...], w_agg_ref[...],
                        preferred_element_type=jnp.float32)
        h = jnp.maximum(h + b_ref[...], 0.0)
        out_ref[...] = h.astype(out_ref.dtype)


def graph_conv(features, A, weight, bias, *, node_tile=256, use_bf16=False):
    """GraphConv forward.

    features: (B, N, D) or (N, D) float32
    A:        (B, N, N) or (N, N) row-normalized adjacency, float32
    weight:   (2*D, F)   bias: (F,)
    node_tile must be a multiple of 128 (used when N > node_tile).
    """
    squeeze_batch = features.ndim == 2
    if squeeze_batch:
        features = features[None]
        A = A[None]

    B, N, D = features.shape
    F = weight.shape[-1]
    out_dtype = features.dtype

    # --- padded / tiled geometry --------------------------------------------
    Dp = _round_up(D, 128)                 # lane-dense contraction width
    Fp = _round_up(F, 128)                 # lane-dense output width
    if N <= node_tile:
        T = _round_up(max(N, 8), 8)        # single tile == full (padded) dim
        Np = T
    else:
        T = node_tile                      # multiple of 128
        Np = _round_up(N, T)

    # --- zero-pad operands (exact: padded rows/cols contribute nothing) ------
    feats_p = jnp.pad(features, ((0, 0), (0, Np - N), (0, Dp - D)))
    A_p = jnp.pad(A, ((0, 0), (0, Np - N), (0, Np - N)))
    w_self = jnp.pad(weight[:D], ((0, Dp - D), (0, Fp - F))).astype(jnp.float32)
    w_agg = jnp.pad(weight[D:], ((0, Dp - D), (0, Fp - F))).astype(jnp.float32)
    bias_p = jnp.pad(bias, (0, Fp - F)).reshape(1, Fp).astype(jnp.float32)

    mm_dtype = jnp.bfloat16 if use_bf16 else feats_p.dtype
    feats_mm = feats_p.astype(mm_dtype)
    A_mm = A_p.astype(mm_dtype)

    grid = (B, Np // T, Np // T)           # (batch, row tiles, contraction tiles)

    out_p = pl.pallas_call(
        graphconv_kernel,
        out_shape=jax.ShapeDtypeStruct((B, Np, Fp), out_dtype),
        grid_spec=pltpu.PrefetchScalarGridSpec(
            num_scalar_prefetch=0,
            grid=grid,
            in_specs=[
                # adjacency tile A[b, i-tile, k-tile]
                pl.BlockSpec((pl.Squeezed(), T, T), lambda b, i, k: (b, i, k)),
                # features as aggregation RHS: rows of the k-tile
                pl.BlockSpec((pl.Squeezed(), T, Dp), lambda b, i, k: (b, k, 0)),
                # features as self term: rows of the i-tile (resident across k)
                pl.BlockSpec((pl.Squeezed(), T, Dp), lambda b, i, k: (b, i, 0)),
                # grid-invariant weights / bias (split in wrapper, no in-kernel slicing)
                pl.BlockSpec((Dp, Fp), lambda b, i, k: (0, 0)),
                pl.BlockSpec((Dp, Fp), lambda b, i, k: (0, 0)),
                pl.BlockSpec((1, Fp), lambda b, i, k: (0, 0)),
            ],
            out_specs=pl.BlockSpec((pl.Squeezed(), T, Fp),
                                   lambda b, i, k: (b, i, 0)),
            scratch_shapes=[pltpu.VMEM((T, Dp), jnp.float32)],
        ),
        compiler_params=pltpu.CompilerParams(
            dimension_semantics=("parallel", "parallel", "arbitrary"),
            # stays well under v7x's 64 MiB VMEM while allowing larger tiles
            vmem_limit_bytes=48 * 1024 * 1024,
        ),
    )(A_mm, feats_mm, feats_mm, w_self, w_agg, bias_p)

    out = out_p[:, :N, :F]
    if squeeze_batch:
        out = out[0]
    return out


def reference(features, A, weight, bias, precision=None):
    agg = jnp.einsum('bij,bjd->bid', A, features, precision=precision)
    cat = jnp.concatenate([features, agg], axis=-1)
    out = jnp.einsum('bnd,df->bnf', cat, weight, precision=precision)
    return jnp.maximum(out + bias, 0.0)


def _make_inputs(key, B, N, D, F):
    k_feat, k_adj, k_w = jax.random.split(key, 3)
    features = jax.random.normal(k_feat, (B, N, D), dtype=jnp.float32)
    # row-normalized adjacency with self loops (MeanAggregator)
    adj_raw = (jax.random.uniform(k_adj, (B, N, N)) > 0.5).astype(jnp.float32)
    adj_raw = adj_raw + jnp.eye(N, dtype=jnp.float32)[None]
    A = adj_raw / jnp.sum(adj_raw, axis=-1, keepdims=True)
    # xavier_uniform_ for weight (fan_in = 2*D, fan_out = F), bias = 0
    bound = (6.0 / (2 * D + F)) ** 0.5
    weight = jax.random.uniform(k_w, (2 * D, F),
                                minval=-bound, maxval=bound, dtype=jnp.float32)
    bias = jnp.zeros((F,), dtype=jnp.float32)
    return features, A, weight, bias


if __name__ == "__main__":
    key = jax.random.PRNGKey(0)
    k1, k2 = jax.random.split(key)

    # --- small case (matches the module's typical toy sizes) -----------------
    B, N, D, F = 2, 16, 32, 32
    features, A, weight, bias = _make_inputs(k1, B, N, D, F)

    out = jax.block_until_ready(graph_conv(features, A, weight, bias))
    ref = reference(features, A, weight, bias,
                    precision=jax.lax.Precision.HIGHEST)
    assert out.shape == (B, N, F)
    assert jnp.allclose(out, ref, atol=1e-5, rtol=1e-5), "small-case mismatch"

    # --- 2-D features path (features.dim() == 2 branch of the module) --------
    out2d = jax.block_until_ready(graph_conv(features[0], A[0], weight, bias))
    assert out2d.shape == (N, F)
    assert jnp.allclose(out2d, ref[0], atol=1e-5, rtol=1e-5), "2-D path mismatch"

    # --- larger case exercising node/contraction tiling + padding ------------
    B2, N2, D2, F2 = 2, 384, 64, 48
    features2, A2, weight2, bias2 = _make_inputs(k2, B2, N2, D2, F2)

    out_big = jax.block_until_ready(graph_conv(features2, A2, weight2, bias2))
    ref_big = reference(features2, A2, weight2, bias2,
                        precision=jax.lax.Precision.HIGHEST)
    assert out_big.shape == (B2, N2, F2)
    assert jnp.allclose(out_big, ref_big, atol=1e-3, rtol=1e-3), \
        "tiled-case mismatch"

    print("KERNEL_OK")
</pallas_src>

<mosaic_0001>
module attributes {stable_mosaic.version = 11 : i64} {
  func.func @graphconv_kernel(%arg0: i32, %arg1: i32, %arg2: i32, %arg3: memref<1x16x16xf32, #tpu.memory_space<vmem>>, %arg4: memref<1x16x128xf32, #tpu.memory_space<vmem>>, %arg5: memref<1x16x128xf32, #tpu.memory_space<vmem>>, %arg6: memref<128x128xf32, #tpu.memory_space<vmem>>, %arg7: memref<128x128xf32, #tpu.memory_space<vmem>>, %arg8: memref<1x128xf32, #tpu.memory_space<vmem>>, %arg9: memref<1x16x128xf32, #tpu.memory_space<vmem>>, %arg10: memref<16x128xf32, #tpu.memory_space<vmem>>) attributes {dimension_semantics = [#tpu.dimension_semantics<parallel>, #tpu.dimension_semantics<parallel>, #tpu.dimension_semantics<arbitrary>], iteration_bounds = array<i64: 2, 1, 1>, scalar_prefetch = 0 : i64, scratch_operands = 1 : i64, tpu.core_type = #tpu.core_type<tc>, window_params = [{transform_indices = @transform_0, window_bounds = array<i64: 1, 16, 16>}, {transform_indices = @transform_1, window_bounds = array<i64: 1, 16, 128>}, {transform_indices = @transform_2, window_bounds = array<i64: 1, 16, 128>}, {pipeline_mode = #tpu.pipeline_mode<synchronous>, transform_indices = @transform_3, window_bounds = array<i64: 128, 128>}, {pipeline_mode = #tpu.pipeline_mode<synchronous>, transform_indices = @transform_4, window_bounds = array<i64: 128, 128>}, {pipeline_mode = #tpu.pipeline_mode<synchronous>, transform_indices = @transform_5, window_bounds = array<i64: 1, 128>}, {transform_indices = @transform_6, window_bounds = array<i64: 1, 16, 128>}]} {
    %c0_i32 = arith.constant 0 : i32
    %0 = arith.cmpi eq, %arg2, %c0_i32 : i32
    %1 = arith.extui %0 : i1 to i32
    %c0_i32_0 = arith.constant 0 : i32
    %2 = arith.cmpi ne, %1, %c0_i32_0 : i32
    scf.if %2 {
      %cst_12 = arith.constant 0.000000e+00 : f32
      %14 = vector.broadcast %cst_12 : f32 to vector<16x128xf32>
      %c0_13 = arith.constant 0 : index
      %c0_14 = arith.constant 0 : index
      %15 = vector.load %arg10[%c0_13, %c0_14] : memref<16x128xf32, #tpu.memory_space<vmem>>, vector<16x128xf32>
      tpu.vector_store %arg10[%c0_13, %c0_14], %14 {strides = array<i32>} : memref<16x128xf32, #tpu.memory_space<vmem>>, vector<16x128xf32>,
    } else {
    }
    %c0 = arith.constant 0 : index
    %c0_1 = arith.constant 0 : index
    %3 = vector.load %arg10[%c0, %c0_1] : memref<16x128xf32, #tpu.memory_space<vmem>>, vector<16x128xf32>
    %c0_2 = arith.constant 0 : index
    %c0_3 = arith.constant 0 : index
    %c0_4 = arith.constant 0 : index
    %4 = vector.load %arg3[%c0_2, %c0_3, %c0_4] : memref<1x16x16xf32, #tpu.memory_space<vmem>>, vector<1x16x16xf32>
    %5 = vector.shape_cast %4 : vector<1x16x16xf32> to vector<16x16xf32>
    %c0_5 = arith.constant 0 : index
    %c0_6 = arith.constant 0 : index
    %c0_7 = arith.constant 0 : index
    %6 = vector.load %arg4[%c0_5, %c0_6, %c0_7] : memref<1x16x128xf32, #tpu.memory_space<vmem>>, vector<1x16x128xf32>
    %7 = vector.shape_cast %6 : vector<1x16x128xf32> to vector<16x128xf32>
    %cst = arith.constant dense<0.000000e+00> : vector<16x128xf32>
    %8 = tpu.matmul %5, %7, %cst {dimension_numbers = #tpu.dot_dimension_numbers<[1], [0], [0], [1], [0, 0, 1, 1], [], []>} : vector<16x16xf32>, vector<16x128xf32>, vector<16x128xf32> -> vector<16x128xf32>
    %9 = arith.addf %3, %8 : vector<16x128xf32>
    %c0_8 = arith.constant 0 : index
    %c0_9 = arith.constant 0 : index
    %10 = vector.load %arg10[%c0_8, %c0_9] : memref<16x128xf32, #tpu.memory_space<vmem>>, vector<16x128xf32>
    tpu.vector_store %arg10[%c0_8, %c0_9], %9 {strides = array<i32>} : memref<16x128xf32, #tpu.memory_space<vmem>>, vector<16x128xf32>,
    %c0_i32_10 = arith.constant 0 : i32
    %11 = arith.cmpi eq, %arg2, %c0_i32_10 : i32
    %12 = arith.extui %11 : i1 to i32
    %c0_i32_11 = arith.constant 0 : i32
    %13 = arith.cmpi ne, %12, %c0_i32_11 : i32
    scf.if %13 {
      %c0_12 = arith.constant 0 : index
      %c0_13 = arith.constant 0 : index
      %c0_14 = arith.constant 0 : index
      %14 = vector.load %arg5[%c0_12, %c0_13, %c0_14] : memref<1x16x128xf32, #tpu.memory_space<vmem>>, vector<1x16x128xf32>
      %15 = vector.shape_cast %14 : vector<1x16x128xf32> to vector<16x128xf32>
      %c0_15 = arith.constant 0 : index
      %c0_16 = arith.constant 0 : index
      %16 = vector.load %arg6[%c0_15, %c0_16] : memref<128x128xf32, #tpu.memory_space<vmem>>, vector<128x128xf32>
      %cst_17 = arith.constant dense<0.000000e+00> : vector<16x128xf32>
      %17 = tpu.matmul %15, %16, %cst_17 {dimension_numbers = #tpu.dot_dimension_numbers<[1], [0], [0], [1], [0, 0, 1, 1], [], []>} : vector<16x128xf32>, vector<128x128xf32>, vector<16x128xf32> -> vector<16x128xf32>
      %c0_18 = arith.constant 0 : index
      %c0_19 = arith.constant 0 : index
      %18 = vector.load %arg10[%c0_18, %c0_19] : memref<16x128xf32, #tpu.memory_space<vmem>>, vector<16x128xf32>
      %c0_20 = arith.constant 0 : index
      %c0_21 = arith.constant 0 : index
      %19 = vector.load %arg7[%c0_20, %c0_21] : memref<128x128xf32, #tpu.memory_space<vmem>>, vector<128x128xf32>
      %cst_22 = arith.constant dense<0.000000e+00> : vector<16x128xf32>
      %20 = tpu.matmul %18, %19, %cst_22 {dimension_numbers = #tpu.dot_dimension_numbers<[1], [0], [0], [1], [0, 0, 1, 1], [], []>} : vector<16x128xf32>, vector<128x128xf32>, vector<16x128xf32> -> vector<16x128xf32>
      %21 = arith.addf %17, %20 : vector<16x128xf32>
      %c0_23 = arith.constant 0 : index
      %c0_24 = arith.constant 0 : index
      %22 = vector.load %arg8[%c0_23, %c0_24] : memref<1x128xf32, #tpu.memory_space<vmem>>, vector<1x128xf32>
      %23 = vector.broadcast %22 : vector<1x128xf32> to vector<16x128xf32>
      %24 = arith.addf %21, %23 : vector<16x128xf32>
      %cst_25 = arith.constant 0.000000e+00 : f32
      %25 = vector.broadcast %cst_25 : f32 to vector<16x128xf32>
      %26 = arith.maximumf %24, %25 : vector<16x128xf32>
      %c0_26 = arith.constant 0 : index
      %c0_27 = arith.constant 0 : index
      %c0_28 = arith.constant 0 : index
      %27 = vector.load %arg9[%c0_26, %c0_27, %c0_28] : memref<1x16x128xf32, #tpu.memory_space<vmem>>, vector<1x16x128xf32>
      %28 = vector.shape_cast %27 : vector<1x16x128xf32> to vector<16x128xf32>
      %29 = vector.shape_cast %26 : vector<16x128xf32> to vector<1x16x128xf32>
      tpu.vector_store %arg9[%c0_26, %c0_27, %c0_28], %29 {strides = array<i32>} : memref<1x16x128xf32, #tpu.memory_space<vmem>>, vector<1x16x128xf32>,
    } else {
    }
    return
  }
  func.func @transform_0(%arg0: i32, %arg1: i32, %arg2: i32) -> (i32, i32, i32) {
    %c0_i32 = arith.constant 0 : i32
    return %arg0, %arg1, %arg2 : i32, i32, i32
  }
  func.func @transform_1(%arg0: i32, %arg1: i32, %arg2: i32) -> (i32, i32, i32) {
    %c0_i32 = arith.constant 0 : i32
    %c0_i32_0 = arith.constant 0 : i32
    return %arg0, %arg2, %c0_i32 : i32, i32, i32
  }
  func.func @transform_2(%arg0: i32, %arg1: i32, %arg2: i32) -> (i32, i32, i32) {
    %c0_i32 = arith.constant 0 : i32
    %c0_i32_0 = arith.constant 0 : i32
    return %arg0, %arg1, %c0_i32 : i32, i32, i32
  }
  func.func @transform_3(%arg0: i32, %arg1: i32, %arg2: i32) -> (i32, i32) {
    %c0_i32 = arith.constant 0 : i32
    %c0_i32_0 = arith.constant 0 : i32
    %c0_i32_1 = arith.constant 0 : i32
    return %c0_i32, %c0_i32_0 : i32, i32
  }
  func.func @transform_4(%arg0: i32, %arg1: i32, %arg2: i32) -> (i32, i32) {
    %c0_i32 = arith.constant 0 : i32
    %c0_i32_0 = arith.constant 0 : i32
    %c0_i32_1 = arith.constant 0 : i32
    return %c0_i32, %c0_i32_0 : i32, i32
  }
  func.func @transform_5(%arg0: i32, %arg1: i32, %arg2: i32) -> (i32, i32) {
    %c0_i32 = arith.constant 0 : i32
    %c0_i32_0 = arith.constant 0 : i32
    %c0_i32_1 = arith.constant 0 : i32
    return %c0_i32, %c0_i32_0 : i32, i32
  }
  func.func @transform_6(%arg0: i32, %arg1: i32, %arg2: i32) -> (i32, i32, i32) {
    %c0_i32 = arith.constant 0 : i32
    %c0_i32_0 = arith.constant 0 : i32
    return %arg0, %arg1, %c0_i32 : i32, i32, i32
  }
}

</mosaic_0001>

<llo_original>
// kernel: tpu_custom_call.1
$region0: #{tpu_custom_call.1}
  #allocation0 [shape = 'u32[]', space=smem, size = 0x4, offset = 0x4, fixed_abs, tag = 'smem constant byte address 0x4 - core index']
  #allocation1 [shape = 'u32[72,128]{1,0:T(1,128)}', space=vmem, size = 0x9000, scoped, tag = 'internal scratch']
  #allocation2 [shape = 'f32[16,128]{1,0:T(8,128)}', space=vmem, size = 0x2000, scoped, tag = 'scratch operand']
  %s0 = inlined_call_operand.hbm [shape: f32[2,16,16], index: 0, kind: input, shape index: {}]
  %s1 = inlined_call_operand.hbm [shape: f32[2,16,128], index: 1, kind: input, shape index: {}]
  %s2 = inlined_call_operand.hbm [shape: f32[2,16,128], index: 2, kind: input, shape index: {}]
  %s3 = inlined_call_operand.hbm [shape: f32[128,128], index: 3, kind: input, shape index: {}]
  %s4 = inlined_call_operand.hbm [shape: f32[128,128], index: 4, kind: input, shape index: {}]
  %s5 = inlined_call_operand.vmem [shape: f32[1,128], index: 5, kind: input, shape index: {}]
  %s6 = inlined_call_operand.hbm [shape: f32[2,16,128], index: 6, kind: output, shape index: {}]
  %s7 = sld [smem:[#allocation0]]
  $region85: #{tpu_custom_call.1} parent=0
    _
  %s9 = ssub.s32 1, %s7
  %s10 = scalar_select 0, %s9, %s7
  $region1: #{tpu_custom_call.1} parent=0
    #allocation3 [shape = 'u8[16384]{0}', space=vmem, size = 0x4000, scoped, tag = 'input window, operand 0']
    #allocation4 [shape = 's32[2]{0}', space=sflag, size = 0x8, scoped, tag = 'scoped memory for tpu_custom_call.1']
    #allocation5 [shape = 's32[2]{0}', space=sflag, size = 0x8, scoped, tag = 'scoped memory for tpu_custom_call.1']
    #allocation6 [shape = 'u8[16384]{0}', space=vmem, size = 0x4000, scoped, tag = 'input window, operand 1']
    #allocation7 [shape = 's32[2]{0}', space=sflag, size = 0x8, scoped, tag = 'scoped memory for tpu_custom_call.1']
    #allocation8 [shape = 'u8[16384]{0}', space=vmem, size = 0x4000, scoped, tag = 'input window, operand 2']
    #allocation9 [shape = 'u8[65536]{0}', space=vmem, size = 0x10000, scoped, tag = 'input window, operand 3, single buffered']
    #allocation10 [shape = 's32[1]{0}', space=sflag, size = 0x4, scoped, tag = 'scoped memory for tpu_custom_call.1']
    #allocation11 [shape = 'u8[65536]{0}', space=vmem, size = 0x10000, scoped, tag = 'input window, operand 4, single buffered']
    #allocation12 [shape = 'u8[16384]{0}', space=vmem, size = 0x4000, scoped, tag = 'output window, operand 0']
    %11 = vsyncpa [#allocation4], 0
    %s12 = scalar_lea.sflag [#allocation4], 1
    %13 = vsyncpa %s12, 0
    %14 = vsyncpa [#allocation7], 0
    %s15 = scalar_lea.sflag [#allocation7], 1
    %16 = vsyncpa %s15, 0
    %17 = vsyncpa [#allocation10], 0
    %18 = vsyncpa [#allocation5], 0
    %s19 = scalar_lea.sflag [#allocation5], 1
    %20 = vsyncpa %s19, 0
    loop: start=0, step=1, limit=4
    $region2: #{tpu_custom_call.1} parent=1 // loop_pre_header
      _
    $region3: #{tpu_custom_call.1} parent=1 // loop_header
      %s22 = sphi 0, %s26
      %p23 = scmp.ge.s32.totalorder %s22, 4
      %s29 = sphi 0, %s48
      %s30 = sphi 0, %s44
      %s31 = sphi 0, %s40
      %s32 = sphi 0, %s29
      %s33 = sphi 0, %s30
      %s34 = sphi 0, %s31
      %s35 = sphi 0, %s32
      %s36 = sphi 0, %s33
      %s37 = sphi 0, %s34
      %s55 = sphi 0, %s57
      %s58 = sphi 0, %s55
      %s59 = sphi 0, %s58
      %s75 = sphi 0, %s59
      %s83 = sphi 0, %s85
      %s86 = sphi 0, %s83
      %s87 = sphi 0, %s86
      %s103 = sphi 0, %s87
      %s111 = sphi 0, %s113
      %s114 = sphi 0, %s111
      %s115 = sphi 0, %s114
      %s131 = sphi 0, %s115
      %s135 = sphi 0, %s135
      %s137 = sphi 0, %s135
      %s138 = sphi 0, %s137
      %s152 = sphi 0, %s138
      %s156 = sphi 0, %s156
      %s158 = sphi 0, %s156
      %s159 = sphi 0, %s158
      %s173 = sphi 0, %s159
      %s177 = sphi 0, %s177
      %s179 = sphi 0, %s177
      %s180 = sphi 0, %s179
      %s194 = sphi 0, %s180
      %s202 = sphi 0, %s204
      %s205 = sphi 0, %s202
      %s206 = sphi 0, %s205
      %s222 = sphi 0, %s206
    $region4: #{tpu_custom_call.1} parent=1 // loop_header_branch
      %25 = sbr.rel (%p23) target = $region8
    $region5: #{tpu_custom_call.1} parent=1 // loop_body
      %s27 = ssub.s32 %s22, 1
      %s28 = ssub.s32 %s22, 2
      %s38 = sadd.s32 1, %s31
      %p39 = scmp.ge.s32.totalorder %s38, 1
      %s40 = scalar_select %p39, 0, %s38
      %s41 = sadd.s32 1, %s30
      %s42 = scalar_select %p39, %s41, %s30
      %p43 = scmp.ge.s32.totalorder %s42, 1
      %s44 = scalar_select %p43, 0, %s42
      %s45 = sadd.s32 1, %s29
      %s46 = scalar_select %p43, %s45, %s29
      %p47 = scmp.ge.s32.totalorder %s46, 2
      %s48 = scalar_select %p47, 0, %s46
      %s49 = ssub.s32 %s29, %s48
      %s50 = ssub.s32 %s30, %s44
      %s51 = sor.u32 %s49, %s50
      %s52 = ssub.s32 %s31, %s40
      %s53 = sor.u32 %s51, %s52
      %p54 = scmp.eq.s32.totalorder %s53, 0
      %s56 = sadd.s32 %s55, 1
      %s57 = scalar_select %p54, %s55, %s56
      %p60 = pneg %p54
      %p61 = scmp.eq.s32.totalorder %s22, 1
      %p62 = por %p60, %p61
      %p63 = scmp.ne.s32.totalorder %s55, %s58
      %p64 = scmp.eq.s32.totalorder %s22, 0
      %p65 = por %p63, %p64
      %p66 = scmp.ne.s32.totalorder %s55, %s58
      %p67 = scmp.eq.s32.totalorder %s27, 1
      %p68 = por %p66, %p67
      %p69 = scmp.ne.s32.totalorder %s58, %s59
      %p70 = scmp.eq.s32.totalorder %s27, 0
      %p71 = por %p69, %p70
      %p72 = scmp.ne.s32.totalorder %s58, %s59
      %p73 = scmp.eq.s32.totalorder %s28, 1
      %p74 = por %p72, %p73
      %p76 = scmp.ne.s32.totalorder %s59, %s75
      %p77 = scmp.eq.s32.totalorder %s28, 0
      %p78 = por %p76, %p77
      %s79 = ssub.s32 %s29, %s48
      %s80 = ssub.s32 %s31, %s40
      %s81 = sor.u32 %s79, %s80
      %p82 = scmp.eq.s32.totalorder %s81, 0
      %s84 = sadd.s32 %s83, 1
      %s85 = scalar_select %p82, %s83, %s84
      %p88 = pneg %p82
      %p89 = scmp.eq.s32.totalorder %s22, 1
      %p90 = por %p88, %p89
      %p91 = scmp.ne.s32.totalorder %s83, %s86
      %p92 = scmp.eq.s32.totalorder %s22, 0
      %p93 = por %p91, %p92
      %p94 = scmp.ne.s32.totalorder %s83, %s86
      %p95 = scmp.eq.s32.totalorder %s27, 1
      %p96 = por %p94, %p95
      %p97 = scmp.ne.s32.totalorder %s86, %s87
      %p98 = scmp.eq.s32.totalorder %s27, 0
      %p99 = por %p97, %p98
      %p100 = scmp.ne.s32.totalorder %s86, %s87
      %p101 = scmp.eq.s32.totalorder %s28, 1
      %p102 = por %p100, %p101
      %p104 = scmp.ne.s32.totalorder %s87, %s103
      %p105 = scmp.eq.s32.totalorder %s28, 0
      %p106 = por %p104, %p105
      %s107 = ssub.s32 %s29, %s48
      %s108 = ssub.s32 %s30, %s44
      %s109 = sor.u32 %s107, %s108
      %p110 = scmp.eq.s32.totalorder %s109, 0
      %s112 = sadd.s32 %s111, 1
      %s113 = scalar_select %p110, %s111, %s112
      %p116 = pneg %p110
      %p117 = scmp.eq.s32.totalorder %s22, 1
      %p118 = por %p116, %p117
      %p119 = scmp.ne.s32.totalorder %s111, %s114
      %p120 = scmp.eq.s32.totalorder %s22, 0
      %p121 = por %p119, %p120
      %p122 = scmp.ne.s32.totalorder %s111, %s114
      %p123 = scmp.eq.s32.totalorder %s27, 1
      %p124 = por %p122, %p123
      %p125 = scmp.ne.s32.totalorder %s114, %s115
      %p126 = scmp.eq.s32.totalorder %s27, 0
      %p127 = por %p125, %p126
      %p128 = scmp.ne.s32.totalorder %s114, %s115
      %p129 = scmp.eq.s32.totalorder %s28, 1
      %p130 = por %p128, %p129
      %p132 = scmp.ne.s32.totalorder %s115, %s131
      %p133 = scmp.eq.s32.totalorder %s28, 0
      %p134 = por %p132, %p133
      %s136 = sadd.s32 %s135, 1
      %p139 = scmp.eq.s32.totalorder %s22, 1
      %p140 = scmp.ne.s32.totalorder %s135, %s137
      %p141 = scmp.eq.s32.totalorder %s22, 0
      %p142 = por %p140, %p141
      %p143 = scmp.ne.s32.totalorder %s135, %s137
      %p144 = scmp.eq.s32.totalorder %s27, 1
      %p145 = por %p143, %p144
      %p146 = scmp.ne.s32.totalorder %s137, %s138
      %p147 = scmp.eq.s32.totalorder %s27, 0
      %p148 = por %p146, %p147
      %p149 = scmp.ne.s32.totalorder %s137, %s138
      %p150 = scmp.eq.s32.totalorder %s28, 1
      %p151 = por %p149, %p150
      %p153 = scmp.ne.s32.totalorder %s138, %s152
      %p154 = scmp.eq.s32.totalorder %s28, 0
      %p155 = por %p153, %p154
      %s157 = sadd.s32 %s156, 1
      %p160 = scmp.eq.s32.totalorder %s22, 1
      %p161 = scmp.ne.s32.totalorder %s156, %s158
      %p162 = scmp.eq.s32.totalorder %s22, 0
      %p163 = por %p161, %p162
      %p164 = scmp.ne.s32.totalorder %s156, %s158
      %p165 = scmp.eq.s32.totalorder %s27, 1
      %p166 = por %p164, %p165
      %p167 = scmp.ne.s32.totalorder %s158, %s159
      %p168 = scmp.eq.s32.totalorder %s27, 0
      %p169 = por %p167, %p168
      %p170 = scmp.ne.s32.totalorder %s158, %s159
      %p171 = scmp.eq.s32.totalorder %s28, 1
      %p172 = por %p170, %p171
      %p174 = scmp.ne.s32.totalorder %s159, %s173
      %p175 = scmp.eq.s32.totalorder %s28, 0
      %p176 = por %p174, %p175
      %s178 = sadd.s32 %s177, 1
      %p181 = scmp.eq.s32.totalorder %s22, 1
      %p182 = scmp.ne.s32.totalorder %s177, %s179
      %p183 = scmp.eq.s32.totalorder %s22, 0
      %p184 = por %p182, %p183
      %p185 = scmp.ne.s32.totalorder %s177, %s179
      %p186 = scmp.eq.s32.totalorder %s27, 1
      %p187 = por %p185, %p186
      %p188 = scmp.ne.s32.totalorder %s179, %s180
      %p189 = scmp.eq.s32.totalorder %s27, 0
      %p190 = por %p188, %p189
      %p191 = scmp.ne.s32.totalorder %s179, %s180
      %p192 = scmp.eq.s32.totalorder %s28, 1
      %p193 = por %p191, %p192
      %p195 = scmp.ne.s32.totalorder %s180, %s194
      %p196 = scmp.eq.s32.totalorder %s28, 0
      %p197 = por %p195, %p196
      %s198 = ssub.s32 %s29, %s48
      %s199 = ssub.s32 %s30, %s44
      %s200 = sor.u32 %s198, %s199
      %p201 = scmp.eq.s32.totalorder %s200, 0
      %s203 = sadd.s32 %s202, 1
      %s204 = scalar_select %p201, %s202, %s203
      %p207 = pneg %p201
      %p208 = scmp.eq.s32.totalorder %s22, 1
      %p209 = por %p207, %p208
      %p210 = scmp.ne.s32.totalorder %s202, %s205
      %p211 = scmp.eq.s32.totalorder %s22, 0
      %p212 = por %p210, %p211
      %p213 = scmp.ne.s32.totalorder %s202, %s205
      %p214 = scmp.eq.s32.totalorder %s27, 1
      %p215 = por %p213, %p214
      %p216 = scmp.ne.s32.totalorder %s205, %s206
      %p217 = scmp.eq.s32.totalorder %s27, 0
      %p218 = por %p216, %p217
      %p219 = scmp.ne.s32.totalorder %s205, %s206
      %p220 = scmp.eq.s32.totalorder %s28, 1
      %p221 = por %p219, %p220
      %p223 = scmp.ne.s32.totalorder %s206, %s222
      %p224 = scmp.eq.s32.totalorder %s28, 0
      %p225 = por %p223, %p224
      %p226 = scmp.le.s32.totalorder 1, %s22
      %p227 = scmp.lt.s32.totalorder %s22, 3
      %p228 = pnand %p226, %p227
      %p229 = pneg %p228
      // Predicated region
      $region9: #{tpu_custom_call.1} parent=5 // pred_check
        _
      $region10: #{tpu_custom_call.1} parent=5 // pred_check_branch
        %231 = sbr.rel (%p228) target = $region12
      $region11: #{tpu_custom_call.1} parent=5 // pred_region
        %s232 = ssub.s32 %s22, 1
        // Predicated region
        $region13: #{tpu_custom_call.1} parent=11 // pred_check
          %p233 = pneg %p148
        $region14: #{tpu_custom_call.1} parent=11 // pred_check_branch
          %235 = sbr.rel (%p233) target = $region16
        $region15: #{tpu_custom_call.1} parent=11 // pred_region
          %237 = vsyncadd [#allocation10], 0
          %s238 = sshll.u32 %s3, 4
          %s239 = int_to_ptr.hbm [resolvable:$true] %s238
          %s240 = sshll.u32 [#allocation9], 4
          %s241 = int_to_ptr.vmem [resolvable:$true] %s240
          %246 = dma.hbm_to_vmem [thread:$0]  %s239, 2048, %s241, [#allocation10], 128, 128, 8
        $region16: #{tpu_custom_call.1} parent=11 // pred_fallthru
          _
        // Predicated region
        $region17: #{tpu_custom_call.1} parent=11 // pred_check
          %p247 = pneg %p169
        $region18: #{tpu_custom_call.1} parent=11 // pred_check_branch
          %249 = sbr.rel (%p247) target = $region20
        $region19: #{tpu_custom_call.1} parent=11 // pred_region
          %251 = vsyncadd [#allocation10], 0
          %s252 = sshll.u32 %s4, 4
          %s253 = int_to_ptr.hbm [resolvable:$true] %s252
          %s254 = sshll.u32 [#allocation11], 4
          %s255 = int_to_ptr.vmem [resolvable:$true] %s254
          %260 = dma.hbm_to_vmem [thread:$0]  %s253, 2048, %s255, [#allocation10], 128, 128, 8
        $region20: #{tpu_custom_call.1} parent=11 // pred_fallthru
          _
        // Predicated region
        $region21: #{tpu_custom_call.1} parent=11 // pred_check
          %p261 = pneg %p190
        $region22: #{tpu_custom_call.1} parent=11 // pred_check_branch
          %263 = sbr.rel (%p261) target = $region24
        $region23: #{tpu_custom_call.1} parent=11 // pred_region
          _
        $region24: #{tpu_custom_call.1} parent=11 // pred_fallthru
          _
      $region12: #{tpu_custom_call.1} parent=5 // pred_fallthru
        _
      %p264 = scmp.lt.s32.totalorder %s22, 2
      // Predicated region
      $region25: #{tpu_custom_call.1} parent=5 // pred_check
        %p265 = pneg %p264
      $region26: #{tpu_custom_call.1} parent=5 // pred_check_branch
        %267 = sbr.rel (%p265) target = $region28
      $region27: #{tpu_custom_call.1} parent=5 // pred_region
        // Predicated region
        $region29: #{tpu_custom_call.1} parent=27 // pred_check
          %p268 = pneg %p65
        $region30: #{tpu_custom_call.1} parent=27 // pred_check_branch
          %270 = sbr.rel (%p268) target = $region32
        $region31: #{tpu_custom_call.1} parent=27 // pred_region
          %s271 = sand.u32 %s55, 1
          %s272 = scalar_lea.sflag [#allocation4], %s271
          %s273 = sand.u32 %s55, 1
          %s274 = smul.addr %s273, 16
          %s275 = scalar_lea.vmem [#allocation3], %s274
          %s276 = smul.u32 2, %s30
          %278 = vsyncadd %s272, 0
          %s279 = sadd.s32 %s31, %s276
          %s280 = smul.addr %s29, 2
          %s281 = sadd.s32 %s279, %s280
          %s282 = smul.addr %s281, 8
          %s283 = scalar_lea.hbm %s0, %s282
          %s284 = sshll.u32 %s283, 4
          %s285 = int_to_ptr.hbm [resolvable:$true] %s284
          %s286 = sshll.u32 %s275, 4
          %s287 = int_to_ptr.vmem [resolvable:$true] %s286
          %292 = dma.hbm_to_vmem [thread:$0]  %s285, 256, %s287, %s272, 128, 128, 8
        $region32: #{tpu_custom_call.1} parent=27 // pred_fallthru
          _
        // Predicated region
        $region33: #{tpu_custom_call.1} parent=27 // pred_check
          %p293 = pneg %p93
        $region34: #{tpu_custom_call.1} parent=27 // pred_check_branch
          %295 = sbr.rel (%p293) target = $region36
        $region35: #{tpu_custom_call.1} parent=27 // pred_region
          %s296 = sand.u32 %s22, 1
          %s297 = scalar_lea.sflag [#allocation7], %s296
          %s298 = sand.u32 %s83, 1
          %s299 = smul.addr %s298, 16
          %s300 = scalar_lea.vmem [#allocation6], %s299
          %s301 = smul.u32 2, %s31
          %303 = vsyncadd %s297, 0
          %s304 = smul.addr %s29, 2
          %s305 = sadd.s32 %s301, %s304
          %s306 = smul.addr %s305, 8
          %s307 = scalar_lea.hbm %s1, %s306
          %s308 = sshll.u32 %s307, 4
          %s309 = int_to_ptr.hbm [resolvable:$true] %s308
          %s310 = sshll.u32 %s300, 4
          %s311 = int_to_ptr.vmem [resolvable:$true] %s310
          %316 = dma.hbm_to_vmem [thread:$0]  %s309, 256, %s311, %s297, 128, 128, 8
        $region36: #{tpu_custom_call.1} parent=27 // pred_fallthru
          _
        // Predicated region
        $region37: #{tpu_custom_call.1} parent=27 // pred_check
          %p317 = pneg %p121
        $region38: #{tpu_custom_call.1} parent=27 // pred_check_branch
          %319 = sbr.rel (%p317) target = $region40
        $region39: #{tpu_custom_call.1} parent=27 // pred_region
          %s320 = sand.u32 %s22, 1
          %s321 = scalar_lea.sflag [#allocation7], %s320
          %s322 = sand.u32 %s111, 1
          %s323 = smul.addr %s322, 16
          %s324 = scalar_lea.vmem [#allocation8], %s323
          %s325 = smul.u32 2, %s30
          %327 = vsyncadd %s321, 0
          %s328 = smul.addr %s29, 2
          %s329 = sadd.s32 %s325, %s328
          %s330 = smul.addr %s329, 8
          %s331 = scalar_lea.hbm %s2, %s330
          %s332 = sshll.u32 %s331, 4
          %s333 = int_to_ptr.hbm [resolvable:$true] %s332
          %s334 = sshll.u32 %s324, 4
          %s335 = int_to_ptr.vmem [resolvable:$true] %s334
          %340 = dma.hbm_to_vmem [thread:$0]  %s333, 256, %s335, %s321, 128, 128, 8
        $region40: #{tpu_custom_call.1} parent=27 // pred_fallthru
          _
      $region28: #{tpu_custom_call.1} parent=5 // pred_fallthru
        _
      %p341 = scmp.le.s32.totalorder 1, %s22
      %p342 = scmp.lt.s32.totalorder %s22, 3
      %p343 = pnand %p341, %p342
      %p344 = pneg %p343
      // Predicated region
      $region41: #{tpu_custom_call.1} parent=5 // pred_check
        _
      $region42: #{tpu_custom_call.1} parent=5 // pred_check_branch
        %346 = sbr.rel (%p343) target = $region44
      $region43: #{tpu_custom_call.1} parent=5 // pred_region
        %s347 = ssub.s32 %s22, 1
        %s348 = sand.u32 %s58, 1
        %s349 = scalar_lea.sflag [#allocation4], %s348
        %s350 = sand.u32 %s58, 1
        %s351 = smul.addr %s350, 16
        %s352 = scalar_lea.vmem [#allocation3], %s351
        // Predicated region
        $region45: #{tpu_custom_call.1} parent=43 // pred_check
          %p353 = pneg %p71
        $region46: #{tpu_custom_call.1} parent=43 // pred_check_branch
          %355 = sbr.rel (%p353) target = $region48
        $region47: #{tpu_custom_call.1} parent=43 // pred_region
          %357 = dma.done %s349, 256
        $region48: #{tpu_custom_call.1} parent=43 // pred_fallthru
          _
        %s358 = sand.u32 %s27, 1
        %s359 = scalar_lea.sflag [#allocation7], %s358
        %s360 = sand.u32 %s86, 1
        %s361 = smul.addr %s360, 16
        %s362 = scalar_lea.vmem [#allocation6], %s361
        // Predicated region
        $region49: #{tpu_custom_call.1} parent=43 // pred_check
          %p363 = pneg %p99
        $region50: #{tpu_custom_call.1} parent=43 // pred_check_branch
          %365 = sbr.rel (%p363) target = $region52
        $region51: #{tpu_custom_call.1} parent=43 // pred_region
          %367 = dma.done %s359, 256
        $region52: #{tpu_custom_call.1} parent=43 // pred_fallthru
          _
        %s368 = sand.u32 %s27, 1
        %s369 = scalar_lea.sflag [#allocation7], %s368
        %s370 = sand.u32 %s114, 1
        %s371 = smul.addr %s370, 16
        %s372 = scalar_lea.vmem [#allocation8], %s371
        // Predicated region
        $region53: #{tpu_custom_call.1} parent=43 // pred_check
          %p373 = pneg %p127
        $region54: #{tpu_custom_call.1} parent=43 // pred_check_branch
          %375 = sbr.rel (%p373) target = $region56
        $region55: #{tpu_custom_call.1} parent=43 // pred_region
          %377 = dma.done %s369, 256
        $region56: #{tpu_custom_call.1} parent=43 // pred_fallthru
          _
        // Predicated region
        $region57: #{tpu_custom_call.1} parent=43 // pred_check
          %p378 = pneg %p148
        $region58: #{tpu_custom_call.1} parent=43 // pred_check_branch
          %380 = sbr.rel (%p378) target = $region60
        $region59: #{tpu_custom_call.1} parent=43 // pred_region
          %382 = dma.done [#allocation10], 2048
        $region60: #{tpu_custom_call.1} parent=43 // pred_fallthru
          _
        // Predicated region
        $region61: #{tpu_custom_call.1} parent=43 // pred_check
          %p383 = pneg %p169
        $region62: #{tpu_custom_call.1} parent=43 // pred_check_branch
          %385 = sbr.rel (%p383) target = $region64
        $region63: #{tpu_custom_call.1} parent=43 // pred_region
          %387 = dma.done [#allocation10], 2048
        $region64: #{tpu_custom_call.1} parent=43 // pred_fallthru
          _
        %s388 = sand.u32 %s58, 1
        %s389 = scalar_lea.sflag [#allocation4], %s388
        %s390 = sand.u32 %s58, 1
        %s391 = smul.addr %s390, 16
        %s392 = scalar_lea.vmem [#allocation3], %s391
        %p393 = pneg %p71
        %p394 = pneg %p68
        %s395 = sand.u32 %s27, 1
        %s396 = scalar_lea.sflag [#allocation7], %s395
        %s397 = sand.u32 %s86, 1
        %s398 = smul.addr %s397, 16
        %s399 = scalar_lea.vmem [#allocation6], %s398
        %p400 = pneg %p99
        %p401 = pneg %p96
        %s402 = sand.u32 %s27, 1
        %s403 = scalar_lea.sflag [#allocation7], %s402
        %s404 = sand.u32 %s114, 1
        %s405 = smul.addr %s404, 16
        %s406 = scalar_lea.vmem [#allocation8], %s405
        %p407 = pneg %p127
        %p408 = pneg %p124
        %p409 = pneg %p148
        %p410 = pneg %p145
        %p411 = pneg %p169
        %p412 = pneg %p166
        %p413 = pneg %p190
        %p414 = pneg %p187
        %p415 = pneg %p218
        %p416 = pneg %p215
        %s417 = sand.u32 %s205, 1
        %s418 = scalar_lea.sflag [#allocation5], %s417
        %s419 = sand.u32 %s205, 1
        %s420 = smul.addr %s419, 16
        %s421 = scalar_lea.vmem [#allocation12], %s420
        %s422 = smul.u32 2, %s33
        %s423 = smul.u32 2, %s34
        %s424 = smul.u32 2, %s33
        %s425 = smul.u32 2, %s33
        %p426 = scmp.eq.s32.totalorder %s34, 0
        // Predicated region
        $region65: #{tpu_custom_call.1} parent=43 // pred_check
          %p427 = pneg %p426
        $region66: #{tpu_custom_call.1} parent=43 // pred_check_branch
          %429 = sbr.rel (%p427) target = $region68
        $region67: #{tpu_custom_call.1} parent=43 // pred_region
          %430 = vst [vmem:[#allocation2] sm:$0xff] 0.0
          %431 = vst [vmem:[#allocation2 + $0x8] sm:$0xff] 0.0
        $region68: #{tpu_custom_call.1} parent=43 // pred_fallthru
          _
        %v432 = vld [vmem:[#allocation2] sm:$0xff]
        %v433 = vld [vmem:[#allocation2 + $0x8] sm:$0xff]
        %v434 = vld [vmem:[%s352] sm:$0xff]
        %v435 = vld [vmem:[%s352 + $0x8] sm:$0xff]
        %v436 = vld [vmem:[%s362] sm:$0xff]
        %v437 = vld [vmem:[%s362 + $0x8] sm:$0xff]
        %vm438 = vcmask 130048
        %v440 = vsel %vm438, %v434, 0
        %v443 = vsel %vm438, %v435, 0
        %445 = vmatpush.msra.mxu0 0.0
        %446 = vmatpush.msra.mxu0 0.0
        %447 = vmatpush.msra.mxu0 0.0
        %448 = vmatpush.msra.mxu0 0.0
        %449 = vmatpush.msra.mxu0 0.0
        %450 = vmatpush.msra.mxu0 0.0
        %451 = vmatpush.msra.mxu0 0.0
        %452 = vmatpush.msra.mxu0 0.0
        %453 = vmatpush.msra.mxu0 0.0
        %454 = vmatpush.msra.mxu0 0.0
        %455 = vmatpush.msra.mxu0 0.0
        %456 = vmatpush.msra.mxu0 0.0
        %457 = vmatpush.msra.mxu0 0.0
        %458 = vmatpush.msra.mxu0 0.0
        %459 = vmatpush.msra.mxu0 %v437
        %460 = vmatpush.msra.mxu0 %v436
        %461 = vmatmul.f32.gmra.mxu0 %v440
        %v462 = vpop.f32.mrf.mxu0
        %v463 = vadd.f32 0.0, %v462
        %464 = vmatmul.f32.gmra.mxu0 %v443
        %v465 = vpop.f32.mrf.mxu0
        %v466 = vadd.f32 0.0, %v465
        %467 = vdwg.mxu0
        %v468 = vadd.f32 %v432, %v463
        %v469 = vadd.f32 %v433, %v466
        %470 = vst [vmem:[#allocation2] sm:$0xff] %v468
        %471 = vst [vmem:[#allocation2 + $0x8] sm:$0xff] %v469
        // Predicated region
        $region69: #{tpu_custom_call.1} parent=43 // pred_check
          %p472 = pneg %p426
        $region70: #{tpu_custom_call.1} parent=43 // pred_check_branch
          %474 = sbr.rel (%p472) target = $region72
        $region71: #{tpu_custom_call.1} parent=43 // pred_region
          %v475 = vld [vmem:[%s372] sm:$0xff]
          %v476 = vld [vmem:[%s372 + $0x8] sm:$0xff]
          %v477 = vld [vmem:[#allocation9] sm:$0xff]
          %v478 = vld [vmem:[#allocation9 + $0x8] sm:$0xff]
          %v479 = vld [vmem:[#allocation9 + $0x10] sm:$0xff]
          %v480 = vld [vmem:[#allocation9 + $0x18] sm:$0xff]
          %v481 = vld [vmem:[#allocation9 + $0x20] sm:$0xff]
          %v482 = vld [vmem:[#allocation9 + $0x28] sm:$0xff]
          %v483 = vld [vmem:[#allocation9 + $0x30] sm:$0xff]
          %v484 = vld [vmem:[#allocation9 + $0x38] sm:$0xff]
          %v485 = vld [vmem:[#allocation9 + $0x40] sm:$0xff]
          %v486 = vld [vmem:[#allocation9 + $0x48] sm:$0xff]
          %v487 = vld [vmem:[#allocation9 + $0x50] sm:$0xff]
          %v488 = vld [vmem:[#allocation9 + $0x58] sm:$0xff]
          %v489 = vld [vmem:[#allocation9 + $0x60] sm:$0xff]
          %v490 = vld [vmem:[#allocation9 + $0x68] sm:$0xff]
          %v491 = vld [vmem:[#allocation9 + $0x70] sm:$0xff]
          %v492 = vld [vmem:[#allocation9 + $0x78] sm:$0xff]
          %v493 = vld [vmem:[#allocation2] sm:$0xff]
          %v494 = vld [vmem:[#allocation2 + $0x8] sm:$0xff]
          %v495 = vld [vmem:[#allocation11] sm:$0xff]
          %v496 = vld [vmem:[#allocation11 + $0x8] sm:$0xff]
          %v497 = vld [vmem:[#allocation11 + $0x10] sm:$0xff]
          %v498 = vld [vmem:[#allocation11 + $0x18] sm:$0xff]
          %v499 = vld [vmem:[#allocation11 + $0x20] sm:$0xff]
          %v500 = vld [vmem:[#allocation11 + $0x28] sm:$0xff]
          %v501 = vld [vmem:[#allocation11 + $0x30] sm:$0xff]
          %v502 = vld [vmem:[#allocation11 + $0x38] sm:$0xff]
          %v503 = vld [vmem:[#allocation11 + $0x40] sm:$0xff]
          %v504 = vld [vmem:[#allocation11 + $0x48] sm:$0xff]
          %v505 = vld [vmem:[#allocation11 + $0x50] sm:$0xff]
          %v506 = vld [vmem:[#allocation11 + $0x58] sm:$0xff]
          %v507 = vld [vmem:[#allocation11 + $0x60] sm:$0xff]
          %v508 = vld [vmem:[#allocation11 + $0x68] sm:$0xff]
          %v509 = vld [vmem:[#allocation11 + $0x70] sm:$0xff]
          %v510 = vld [vmem:[#allocation11 + $0x78] sm:$0xff]
          %511 = vmatpush.msra.mxu0 %v510
          %512 = vmatpush.msra.mxu0 %v509
          %513 = vmatpush.msra.mxu0 %v508
          %514 = vmatpush.msra.mxu0 %v507
          %515 = vmatpush.msra.mxu0 %v506
          %516 = vmatpush.msra.mxu0 %v505
          %517 = vmatpush.msra.mxu0 %v504
          %518 = vmatpush.msra.mxu0 %v503
          %519 = vmatpush.msra.mxu0 %v502
          %520 = vmatpush.msra.mxu0 %v501
          %521 = vmatpush.msra.mxu0 %v500
          %522 = vmatpush.msra.mxu0 %v499
          %523 = vmatpush.msra.mxu0 %v498
          %524 = vmatpush.msra.mxu0 %v497
          %525 = vmatpush.msra.mxu0 %v496
          %526 = vmatpush.msra.mxu0 %v495
          %527 = vmatmul.f32.gmra.mxu0 %v493
          %v528 = vpop.f32.mrf.mxu0
          %v529 = vadd.f32 0.0, %v528
          %530 = vmatmul.f32.gmra.mxu0 %v494
          %v531 = vpop.f32.mrf.mxu0
          %v532 = vadd.f32 0.0, %v531
          %533 = vdwg.mxu0
          %534 = vmatpush.msra.mxu0 %v492
          %535 = vmatpush.msra.mxu0 %v491
          %536 = vmatpush.msra.mxu0 %v490
          %537 = vmatpush.msra.mxu0 %v489
          %538 = vmatpush.msra.mxu0 %v488
          %539 = vmatpush.msra.mxu0 %v487
          %540 = vmatpush.msra.mxu0 %v486
          %541 = vmatpush.msra.mxu0 %v485
          %542 = vmatpush.msra.mxu0 %v484
          %543 = vmatpush.msra.mxu0 %v483
          %544 = vmatpush.msra.mxu0 %v482
          %545 = vmatpush.msra.mxu0 %v481
          %546 = vmatpush.msra.mxu0 %v480
          %547 = vmatpush.msra.mxu0 %v479
          %548 = vmatpush.msra.mxu0 %v478
          %549 = vmatpush.msra.mxu0 %v477
          %550 = vmatmul.f32.gmra.mxu0 %v475
          %v551 = vpop.f32.mrf.mxu0
          %v552 = vadd.f32 %v529, %v551
          %553 = vmatmul.f32.gmra.mxu0 %v476
          %v554 = vpop.f32.mrf.mxu0
          %v555 = vadd.f32 %v532, %v554
          %556 = vdwg.mxu0
          %v557 = vld [vmem:[%s5] sm:$0x1]
          %v559 = vperm.slane %v557, 0
          %v561 = vadd.f32 %v552, %v559
          %v562 = vadd.f32 %v555, %v559
          %v563 = vmax.f32 %v561, 0.0
          %v564 = vmax.f32 %v562, 0.0
          %565 = vst [vmem:[%s421] sm:$0xff] %v563
          %566 = vst [vmem:[%s421 + $0x8] sm:$0xff] %v564
        $region72: #{tpu_custom_call.1} parent=43 // pred_fallthru
          _
        %s567 = sand.u32 %s205, 1
        %s568 = scalar_lea.sflag [#allocation5], %s567
        %s569 = sand.u32 %s205, 1
        %s570 = smul.addr %s569, 16
        %s571 = scalar_lea.vmem [#allocation12], %s570
        // Predicated region
        $region73: #{tpu_custom_call.1} parent=43 // pred_check
          %p572 = pneg %p215
        $region74: #{tpu_custom_call.1} parent=43 // pred_check_branch
          %574 = sbr.rel (%p572) target = $region76
        $region75: #{tpu_custom_call.1} parent=43 // pred_region
          %s575 = smul.u32 2, %s33
          %577 = vsyncadd %s568, 0
          %s578 = smul.addr %s32, 2
          %s579 = sadd.s32 %s575, %s578
          %s580 = smul.addr %s579, 8
          %s581 = scalar_lea.hbm %s6, %s580
          %s582 = sshll.u32 %s571, 4
          %s583 = int_to_ptr.vmem [resolvable:$true] %s582
          %s584 = sshll.u32 %s581, 4
          %s585 = int_to_ptr.hbm [resolvable:$true] %s584
          %590 = dma.vmem_to_hbm [thread:$0]  %s583, 256, %s585, %s568, 128, 128, 8
        $region76: #{tpu_custom_call.1} parent=43 // pred_fallthru
          _
      $region44: #{tpu_custom_call.1} parent=5 // pred_fallthru
        _
      %p591 = scmp.le.s32.totalorder 2, %s22
      // Predicated region
      $region77: #{tpu_custom_call.1} parent=5 // pred_check
        %p592 = pneg %p591
      $region78: #{tpu_custom_call.1} parent=5 // pred_check_branch
        %594 = sbr.rel (%p592) target = $region80
      $region79: #{tpu_custom_call.1} parent=5 // pred_region
        %s595 = ssub.s32 %s22, 2
        // Predicated region
        $region81: #{tpu_custom_call.1} parent=79 // pred_check
          %p596 = pneg %p221
        $region82: #{tpu_custom_call.1} parent=79 // pred_check_branch
          %598 = sbr.rel (%p596) target = $region84
        $region83: #{tpu_custom_call.1} parent=79 // pred_region
          %s599 = sand.u32 %s206, 1
          %s600 = scalar_lea.sflag [#allocation5], %s599
          %s601 = sand.u32 %s206, 1
          %s602 = smul.addr %s601, 16
          %s603 = scalar_lea.vmem [#allocation12], %s602
          %605 = dma.done %s600, 256
        $region84: #{tpu_custom_call.1} parent=79 // pred_fallthru
          _
      $region80: #{tpu_custom_call.1} parent=5 // pred_fallthru
        _
    $region6: #{tpu_custom_call.1} parent=1 // loop_footer
      %s26 = sadd.s32 1, %s22
    $region7: #{tpu_custom_call.1} parent=1 // loop_footer_branch
      %21 = sbr.rel target = $region3
    $region8: #{tpu_custom_call.1} parent=1 // loop_exit
      _
    %606 = vsyncpa [#allocation4], 1
    %s607 = scalar_lea.sflag [#allocation4], 1
    %608 = vsyncpa %s607, 1
    %609 = vsyncpa [#allocation7], 1
    %s610 = scalar_lea.sflag [#allocation7], 1
    %611 = vsyncpa %s610, 1
    %612 = vsyncpa [#allocation10], 1
    %613 = vsyncpa [#allocation5], 1
    %s614 = scalar_lea.sflag [#allocation5], 1
    %615 = vsyncpa %s614, 1

</llo_original>
